<compile_context>
chip_gen: v7x
topology: tpu7x:2x2x1
jax: 0.10.0
libtpu: 0.0.40
codegen_flags: <defaults>
</compile_context>

<pallas_src>
import jax
import jax.numpy as jnp
from jax.experimental import pallas as pl
from jax.experimental.pallas import tpu as pltpu


def timeblock_kernel(x_ref, wt_ref, wg_ref, bt_ref, bg_ref, o_ref):
    # x_ref : (TM, T*Cin)         tile of flattened (B*N) rows
    # wt_ref: (T*Cin, Tout*Cout)  banded weights for conv1+conv2 (temp branch)
    # wg_ref: (T*Cin, Tout*Cout)  banded weights for conv3 (gate branch)
    # bt_ref: (1, Tout*Cout)      bias (b1+b2) tiled over Tout
    # bg_ref: (1, Tout*Cout)      bias b3 tiled over Tout
    # o_ref : (TM, Tout*Cout)     lane-dense output slab
    x = x_ref[...]                                    # native dtype for MXU
    y_t = jnp.dot(x, wt_ref[...], preferred_element_type=jnp.float32)
    y_g = jnp.dot(x, wg_ref[...], preferred_element_type=jnp.float32)
    temp = y_t + bt_ref[...].astype(jnp.float32)
    gate = jax.nn.sigmoid(y_g + bg_ref[...].astype(jnp.float32))
    o_ref[...] = jnp.maximum(gate * temp, 0.0).astype(o_ref.dtype)


def _banded_weight(wc, T):
    """wc: (K, Cin, Cout) -> dense banded (T*Cin, Tout*Cout) conv-as-matmul weight."""
    K, Cin, Cout = wc.shape
    Tout = T - K + 1
    Wb = jnp.zeros((T, Cin, Tout, Cout), dtype=wc.dtype)
    # TODO(synk): for very long T the dense band wastes ~T/K MXU FLOPs; fine
    # for typical STGCN windows (T ~ 8-16, K = 3) where T*Cin fits one MXU pass.
    for to in range(Tout):
        for k in range(K):
            Wb = Wb.at[to + k, :, to, :].set(wc[k])
    return Wb.reshape(T * Cin, Tout * Cout)


def _choose_block_rows(rows, lanes_in, lanes_out, dtype_bytes,
                       vmem_budget_bytes=8 << 20, max_rows=2048):
    """Largest sublane-aligned row tile whose double-buffered in+out tiles
    stay within a conservative VMEM budget (safe even on v7x's 64 MiB)."""
    bytes_per_row = 2 * (lanes_in + lanes_out) * dtype_bytes   # x2: double buffer
    cap = max(8, vmem_budget_bytes // max(bytes_per_row, 1))
    block_rows = min(max_rows, rows, cap)
    block_rows = max(8, (block_rows // 8) * 8)                 # sublane-aligned
    return block_rows


def time_block(x, w, bias, *, block_rows=None):
    """x: (B, N, T, C_in); w: (3, K, C_in, C_out); bias: (3, C_out)."""
    B, N, T, Cin = x.shape
    _, K, _, Cout = w.shape
    Tout = T - K + 1
    TC = Tout * Cout
    rows = B * N

    # Fused parameters (conv1 + conv2 collapse into a single linear map).
    wt = _banded_weight(w[0] + w[1], T).astype(x.dtype)        # (T*Cin, TC)
    wg = _banded_weight(w[2], T).astype(x.dtype)               # (T*Cin, TC)
    bt = jnp.tile(bias[0] + bias[1], Tout).reshape(1, TC).astype(jnp.float32)
    bg = jnp.tile(bias[2], Tout).reshape(1, TC).astype(jnp.float32)

    dtype_bytes = jnp.dtype(x.dtype).itemsize
    if block_rows is None:
        block_rows = _choose_block_rows(rows, T * Cin, TC, dtype_bytes)
    else:
        block_rows = max(8, (min(block_rows, max(rows, 8)) // 8) * 8)
    n_blocks = pl.cdiv(rows, block_rows)
    rows_padded = n_blocks * block_rows

    x_flat = x.reshape(rows, T * Cin)                          # contiguous: free
    if rows_padded != rows:
        # Row tail padding (rare: B*N not a multiple of the tile). Garbage rows
        # are computed but sliced away below; rows are fully independent.
        x_flat = jnp.pad(x_flat, ((0, rows_padded - rows), (0, 0)))

    out_flat = pl.pallas_call(
        timeblock_kernel,
        out_shape=jax.ShapeDtypeStruct((rows_padded, TC), x.dtype),
        grid_spec=pltpu.PrefetchScalarGridSpec(
            num_scalar_prefetch=0,
            grid=(n_blocks,),
            in_specs=[
                pl.BlockSpec((block_rows, T * Cin), lambda i: (i, 0)),
                pl.BlockSpec((T * Cin, TC), lambda i: (0, 0)),   # resident weights
                pl.BlockSpec((T * Cin, TC), lambda i: (0, 0)),
                pl.BlockSpec((1, TC), lambda i: (0, 0)),
                pl.BlockSpec((1, TC), lambda i: (0, 0)),
            ],
            out_specs=pl.BlockSpec((block_rows, TC), lambda i: (i, 0)),
        ),
        compiler_params=pltpu.CompilerParams(
            dimension_semantics=("parallel",)),
    )(x_flat, wt, wg, bt, bg)

    if rows_padded != rows:
        out_flat = out_flat[:rows]
    return out_flat.reshape(B, N, Tout, Cout)


def time_block_ref(x, w, bias):
    """Pure-JAX reference mirroring the PyTorch semantics."""
    B, N, T, Cin = x.shape
    _, K, _, Cout = w.shape
    Tout = T - K + 1

    def conv(ci):
        acc = jnp.zeros((B, N, Tout, Cout), dtype=jnp.float32)
        for k in range(K):
            acc = acc + jnp.einsum("bntc,cd->bntd", x[:, :, k:k + Tout, :], w[ci, k])
        return acc + bias[ci][None, None, None, :]

    temp = conv(0) + conv(1)
    gate = jax.nn.sigmoid(conv(2))
    return jnp.maximum(gate * temp, 0.0)


if __name__ == "__main__":
    # Small shapes consistent with the module.
    B, N, T = 2, 16, 8
    C_in, C_out, K = 4, 32, 3

    key = jax.random.PRNGKey(0)
    kx, kw, kb = jax.random.split(key, 3)

    x = jax.random.normal(kx, (B, N, T, C_in), dtype=jnp.float32)
    # Deterministic synthetic parameters (3 convs stacked).
    fan_in = C_in * K
    w = jax.random.normal(kw, (3, K, C_in, C_out), dtype=jnp.float32) / jnp.sqrt(fan_in)
    bias = 0.1 * jax.random.normal(kb, (3, C_out), dtype=jnp.float32)

    out = time_block(x, w, bias)
    out = jax.block_until_ready(out)

    ref = time_block_ref(x, w, bias)
    assert out.shape == (B, N, T - K + 1, C_out), out.shape
    assert jnp.allclose(out, ref, atol=1e-4, rtol=1e-4), "mismatch vs reference"

    print("KERNEL_OK")
</pallas_src>

<mosaic_0001>
module attributes {stable_mosaic.version = 11 : i64} {
  func.func @timeblock_kernel(%arg0: i32, %arg1: memref<32x32xf32, #tpu.memory_space<vmem>>, %arg2: memref<32x192xf32, #tpu.memory_space<vmem>>, %arg3: memref<32x192xf32, #tpu.memory_space<vmem>>, %arg4: memref<1x192xf32, #tpu.memory_space<vmem>>, %arg5: memref<1x192xf32, #tpu.memory_space<vmem>>, %arg6: memref<32x192xf32, #tpu.memory_space<vmem>>) attributes {dimension_semantics = [#tpu.dimension_semantics<parallel>], iteration_bounds = array<i64: 1>, scalar_prefetch = 0 : i64, scratch_operands = 0 : i64, tpu.core_type = #tpu.core_type<tc>, window_params = [{transform_indices = @transform_0, window_bounds = array<i64: 32, 32>}, {pipeline_mode = #tpu.pipeline_mode<synchronous>, transform_indices = @transform_1, window_bounds = array<i64: 32, 192>}, {pipeline_mode = #tpu.pipeline_mode<synchronous>, transform_indices = @transform_2, window_bounds = array<i64: 32, 192>}, {pipeline_mode = #tpu.pipeline_mode<synchronous>, transform_indices = @transform_3, window_bounds = array<i64: 1, 192>}, {pipeline_mode = #tpu.pipeline_mode<synchronous>, transform_indices = @transform_4, window_bounds = array<i64: 1, 192>}, {transform_indices = @transform_5, window_bounds = array<i64: 32, 192>}]} {
    %c0 = arith.constant 0 : index
    %c0_0 = arith.constant 0 : index
    %0 = vector.load %arg1[%c0, %c0_0] : memref<32x32xf32, #tpu.memory_space<vmem>>, vector<32x32xf32>
    %c0_1 = arith.constant 0 : index
    %c0_2 = arith.constant 0 : index
    %1 = vector.load %arg2[%c0_1, %c0_2] : memref<32x192xf32, #tpu.memory_space<vmem>>, vector<32x192xf32>
    %cst = arith.constant dense<0.000000e+00> : vector<32x192xf32>
    %2 = tpu.matmul %0, %1, %cst {dimension_numbers = #tpu.dot_dimension_numbers<[1], [0], [0], [1], [0, 0, 1, 1], [], []>} : vector<32x32xf32>, vector<32x192xf32>, vector<32x192xf32> -> vector<32x192xf32>
    %c0_3 = arith.constant 0 : index
    %c0_4 = arith.constant 0 : index
    %3 = vector.load %arg3[%c0_3, %c0_4] : memref<32x192xf32, #tpu.memory_space<vmem>>, vector<32x192xf32>
    %cst_5 = arith.constant dense<0.000000e+00> : vector<32x192xf32>
    %4 = tpu.matmul %0, %3, %cst_5 {dimension_numbers = #tpu.dot_dimension_numbers<[1], [0], [0], [1], [0, 0, 1, 1], [], []>} : vector<32x32xf32>, vector<32x192xf32>, vector<32x192xf32> -> vector<32x192xf32>
    %c0_6 = arith.constant 0 : index
    %c0_7 = arith.constant 0 : index
    %5 = vector.load %arg4[%c0_6, %c0_7] : memref<1x192xf32, #tpu.memory_space<vmem>>, vector<1x192xf32>
    %6 = vector.broadcast %5 : vector<1x192xf32> to vector<32x192xf32>
    %7 = arith.addf %2, %6 : vector<32x192xf32>
    %c0_8 = arith.constant 0 : index
    %c0_9 = arith.constant 0 : index
    %8 = vector.load %arg5[%c0_8, %c0_9] : memref<1x192xf32, #tpu.memory_space<vmem>>, vector<1x192xf32>
    %9 = vector.broadcast %8 : vector<1x192xf32> to vector<32x192xf32>
    %10 = arith.addf %4, %9 : vector<32x192xf32>
    %11 = arith.negf %10 : vector<32x192xf32>
    %12 = math.exp %11 : vector<32x192xf32>
    %cst_10 = arith.constant 1.000000e+00 : f32
    %13 = vector.broadcast %cst_10 : f32 to vector<32x192xf32>
    %14 = arith.addf %13, %12 : vector<32x192xf32>
    %15 = arith.divf %13, %14 : vector<32x192xf32>
    %16 = arith.mulf %15, %7 : vector<32x192xf32>
    %cst_11 = arith.constant 0.000000e+00 : f32
    %17 = vector.broadcast %cst_11 : f32 to vector<32x192xf32>
    %18 = arith.maximumf %16, %17 : vector<32x192xf32>
    %c0_12 = arith.constant 0 : index
    %c0_13 = arith.constant 0 : index
    %19 = vector.load %arg6[%c0_12, %c0_13] : memref<32x192xf32, #tpu.memory_space<vmem>>, vector<32x192xf32>
    tpu.vector_store %arg6[%c0_12, %c0_13], %18 {strides = array<i32>} : memref<32x192xf32, #tpu.memory_space<vmem>>, vector<32x192xf32>,
    return
  }
  func.func @transform_0(%arg0: i32) -> (i32, i32) {
    %c0_i32 = arith.constant 0 : i32
    %c0_i32_0 = arith.constant 0 : i32
    return %arg0, %c0_i32 : i32, i32
  }
  func.func @transform_1(%arg0: i32) -> (i32, i32) {
    %c0_i32 = arith.constant 0 : i32
    %c0_i32_0 = arith.constant 0 : i32
    %c0_i32_1 = arith.constant 0 : i32
    return %c0_i32, %c0_i32_0 : i32, i32
  }
  func.func @transform_2(%arg0: i32) -> (i32, i32) {
    %c0_i32 = arith.constant 0 : i32
    %c0_i32_0 = arith.constant 0 : i32
    %c0_i32_1 = arith.constant 0 : i32
    return %c0_i32, %c0_i32_0 : i32, i32
  }
  func.func @transform_3(%arg0: i32) -> (i32, i32) {
    %c0_i32 = arith.constant 0 : i32
    %c0_i32_0 = arith.constant 0 : i32
    %c0_i32_1 = arith.constant 0 : i32
    return %c0_i32, %c0_i32_0 : i32, i32
  }
  func.func @transform_4(%arg0: i32) -> (i32, i32) {
    %c0_i32 = arith.constant 0 : i32
    %c0_i32_0 = arith.constant 0 : i32
    %c0_i32_1 = arith.constant 0 : i32
    return %c0_i32, %c0_i32_0 : i32, i32
  }
  func.func @transform_5(%arg0: i32) -> (i32, i32) {
    %c0_i32 = arith.constant 0 : i32
    %c0_i32_0 = arith.constant 0 : i32
    return %arg0, %c0_i32 : i32, i32
  }
}

</mosaic_0001>

<llo_original>
// kernel: tpu_custom_call.1
$region0: #{tpu_custom_call.1}
  #allocation0 [shape = 'u32[]', space=smem, size = 0x4, offset = 0x4, fixed_abs, tag = 'smem constant byte address 0x4 - core index']
  #allocation1 [shape = 'u32[144,128]{1,0:T(1,128)}', space=vmem, size = 0x12000, scoped, tag = 'internal scratch']
  %s0 = inlined_call_operand.hbm [shape: f32[32,32], index: 0, kind: input, shape index: {}]
  %s1 = inlined_call_operand.hbm [shape: f32[32,192], index: 1, kind: input, shape index: {}]
  %s2 = inlined_call_operand.hbm [shape: f32[32,192], index: 2, kind: input, shape index: {}]
  %s3 = inlined_call_operand.vmem [shape: f32[1,192], index: 3, kind: input, shape index: {}]
  %s4 = inlined_call_operand.vmem [shape: f32[1,192], index: 4, kind: input, shape index: {}]
  %s5 = inlined_call_operand.hbm [shape: f32[32,192], index: 5, kind: output, shape index: {}]
  %s6 = sld [smem:[#allocation0]]
  $region42: #{tpu_custom_call.1} parent=0
    _
  %s8 = ssub.s32 1, %s6
  %s9 = scalar_select 0, %s8, %s6
  $region1: #{tpu_custom_call.1} parent=0
    #allocation2 [shape = 'u8[16384]{0}', space=vmem, size = 0x4000, scoped, tag = 'input window, operand 0, single buffered']
    #allocation3 [shape = 's32[1]{0}', space=sflag, size = 0x4, scoped, tag = 'scoped memory for tpu_custom_call.1']
    #allocation4 [shape = 's32[1]{0}', space=sflag, size = 0x4, scoped, tag = 'scoped memory for tpu_custom_call.1']
    #allocation5 [shape = 'u8[32768]{0}', space=vmem, size = 0x8000, scoped, tag = 'input window, operand 1, single buffered']
    #allocation6 [shape = 's32[1]{0}', space=sflag, size = 0x4, scoped, tag = 'scoped memory for tpu_custom_call.1']
    #allocation7 [shape = 'u8[32768]{0}', space=vmem, size = 0x8000, scoped, tag = 'input window, operand 2, single buffered']
    #allocation8 [shape = 'u8[32768]{0}', space=vmem, size = 0x8000, scoped, tag = 'output window, operand 0, single buffered']
    %10 = vsyncpa [#allocation3], 0
    %11 = vsyncpa [#allocation6], 0
    %12 = vsyncpa [#allocation4], 0
    // Predicated region
    $region2: #{tpu_custom_call.1} parent=1 // pred_check
      _
    $region3: #{tpu_custom_call.1} parent=1 // pred_check_branch
      %14 = sbr.rel (0) target = $region5
    $region4: #{tpu_custom_call.1} parent=1 // pred_region
      %s16 = ssub.s32 512, 512
      %17 = vsyncadd [#allocation3], %s16
      %s18 = sshll.u32 [#allocation2], 4
      %s19 = int_to_ptr.vmem [resolvable:$true] %s18
      %24 = dma.hbm_to_vmem [thread:$0]  %s0, 512, %s19, [#allocation3], 128, 128, 8
    $region5: #{tpu_custom_call.1} parent=1 // pred_fallthru
      _
    // Predicated region
    $region6: #{tpu_custom_call.1} parent=1 // pred_check
      _
    $region7: #{tpu_custom_call.1} parent=1 // pred_check_branch
      %26 = sbr.rel (0) target = $region9
    $region8: #{tpu_custom_call.1} parent=1 // pred_region
      %s28 = ssub.s32 1024, 1024
      %29 = vsyncadd [#allocation6], %s28
      %s30 = sshll.u32 [#allocation5], 4
      %s31 = int_to_ptr.vmem [resolvable:$true] %s30
      %36 = dma.hbm_to_vmem [thread:$0]  %s1, 1024, %s31, [#allocation6], 256, 256, 16
    $region9: #{tpu_custom_call.1} parent=1 // pred_fallthru
      _
    // Predicated region
    $region10: #{tpu_custom_call.1} parent=1 // pred_check
      _
    $region11: #{tpu_custom_call.1} parent=1 // pred_check_branch
      %38 = sbr.rel (0) target = $region13
    $region12: #{tpu_custom_call.1} parent=1 // pred_region
      %s40 = ssub.s32 1024, 1024
      %41 = vsyncadd [#allocation6], %s40
      %s42 = sshll.u32 [#allocation7], 4
      %s43 = int_to_ptr.vmem [resolvable:$true] %s42
      %48 = dma.hbm_to_vmem [thread:$0]  %s2, 1024, %s43, [#allocation6], 256, 256, 16
    $region13: #{tpu_custom_call.1} parent=1 // pred_fallthru
      _
    // Predicated region
    $region14: #{tpu_custom_call.1} parent=1 // pred_check
      _
    $region15: #{tpu_custom_call.1} parent=1 // pred_check_branch
      %50 = sbr.rel (0) target = $region17
    $region16: #{tpu_custom_call.1} parent=1 // pred_region
      _
    $region17: #{tpu_custom_call.1} parent=1 // pred_fallthru
      _
    // Predicated region
    $region18: #{tpu_custom_call.1} parent=1 // pred_check
      _
    $region19: #{tpu_custom_call.1} parent=1 // pred_check_branch
      %52 = sbr.rel (0) target = $region21
    $region20: #{tpu_custom_call.1} parent=1 // pred_region
      _
    $region21: #{tpu_custom_call.1} parent=1 // pred_fallthru
      _
    // Predicated region
    $region22: #{tpu_custom_call.1} parent=1 // pred_check
      _
    $region23: #{tpu_custom_call.1} parent=1 // pred_check_branch
      %54 = sbr.rel (0) target = $region25
    $region24: #{tpu_custom_call.1} parent=1 // pred_region
      %55 = dma.done [#allocation3], 512
    $region25: #{tpu_custom_call.1} parent=1 // pred_fallthru
      _
    // Predicated region
    $region26: #{tpu_custom_call.1} parent=1 // pred_check
      _
    $region27: #{tpu_custom_call.1} parent=1 // pred_check_branch
      %57 = sbr.rel (0) target = $region29
    $region28: #{tpu_custom_call.1} parent=1 // pred_region
      %58 = dma.done [#allocation6], 1024
    $region29: #{tpu_custom_call.1} parent=1 // pred_fallthru
      _
    // Predicated region
    $region30: #{tpu_custom_call.1} parent=1 // pred_check
      _
    $region31: #{tpu_custom_call.1} parent=1 // pred_check_branch
      %60 = sbr.rel (0) target = $region33
    $region32: #{tpu_custom_call.1} parent=1 // pred_region
      %61 = dma.done [#allocation6], 1024
    $region33: #{tpu_custom_call.1} parent=1 // pred_fallthru
      _
    %v62 = vld [vmem:[#allocation2] sm:$0xff]
    %v63 = vld [vmem:[#allocation2 + $0x8] sm:$0xff]
    %v64 = vld [vmem:[#allocation2 + $0x10] sm:$0xff]
    %v65 = vld [vmem:[#allocation2 + $0x18] sm:$0xff]
    %v66 = vld [vmem:[#allocation5] sm:$0xff]
    %v67 = vld [vmem:[#allocation5 + $0x8] sm:$0xff]
    %v68 = vld [vmem:[#allocation5 + $0x10] sm:$0xff]
    %v69 = vld [vmem:[#allocation5 + $0x18] sm:$0xff]
    %v70 = vld [vmem:[#allocation5 + $0x20] sm:$0xff]
    %v71 = vld [vmem:[#allocation5 + $0x28] sm:$0xff]
    %v72 = vld [vmem:[#allocation5 + $0x30] sm:$0xff]
    %v73 = vld [vmem:[#allocation5 + $0x38] sm:$0xff]
    %v74 = vld [vmem:[#allocation7] sm:$0xff]
    %v75 = vld [vmem:[#allocation7 + $0x8] sm:$0xff]
    %v76 = vld [vmem:[#allocation7 + $0x10] sm:$0xff]
    %v77 = vld [vmem:[#allocation7 + $0x18] sm:$0xff]
    %v78 = vld [vmem:[#allocation7 + $0x20] sm:$0xff]
    %v79 = vld [vmem:[#allocation7 + $0x28] sm:$0xff]
    %v80 = vld [vmem:[#allocation7 + $0x30] sm:$0xff]
    %v81 = vld [vmem:[#allocation7 + $0x38] sm:$0xff]
    %v82 = vld [vmem:[%s3] sm:$0x3]
    %v84 = vlaneseq
    %v85 = vshrl.u32 %v84, 7
    %v86 = vsub.s32 0, %v85
    %v87 = vrot.slane %v82, %v86
    %v88 = vlaneseq
    %v89 = vshrl.u32 %v88, 7
    %v90 = vsub.s32 1, %v89
    %v91 = vrot.slane %v82, %v90
    %vm94 = vcmask 261120
    %v96 = vsel %vm94, %v62, 0
    %v99 = vsel %vm94, %v63, 0
    %v102 = vsel %vm94, %v64, 0
    %v105 = vsel %vm94, %v65, 0
    %107 = vmatprep.subr.mxu0 %v67
    %108 = vmatpush1.msra.mxu0 %v66
    %109 = vmatprep.subr.mxu0 %v69
    %110 = vmatpush1.msra.mxu0 %v68
    %111 = vmatprep.subr.mxu0 %v71
    %112 = vmatpush1.msra.mxu0 %v70
    %113 = vmatprep.subr.mxu0 %v73
    %114 = vmatpush1.msra.mxu0 %v72
    %115 = vmatprep.subr.mxu0 0.0
    %116 = vmatpush1.msra.mxu0 0.0
    %117 = vmatprep.subr.mxu0 0.0
    %118 = vmatpush1.msra.mxu0 0.0
    %119 = vmatprep.subr.mxu0 0.0
    %120 = vmatpush1.msra.mxu0 0.0
    %121 = vmatprep.subr.mxu0 0.0
    %122 = vmatpush1.msra.mxu0 0.0
    %123 = vmatprep.subr.mxu0 0.0
    %124 = vmatpush1.msra.mxu0 0.0
    %125 = vmatprep.subr.mxu0 0.0
    %126 = vmatpush1.msra.mxu0 0.0
    %127 = vmatprep.subr.mxu0 0.0
    %128 = vmatpush1.msra.mxu0 0.0
    %129 = vmatprep.subr.mxu0 0.0
    %130 = vmatpush1.msra.mxu0 0.0
    %131 = vmatprep.subr.mxu0 0.0
    %132 = vmatpush1.msra.mxu0 0.0
    %133 = vmatprep.subr.mxu0 0.0
    %134 = vmatpush1.msra.mxu0 0.0
    %135 = vmatprep.subr.mxu0 0.0
    %136 = vmatpush1.msra.mxu0 0.0
    %137 = vmatprep.subr.mxu0 0.0
    %138 = vmatpush1.msra.mxu0 0.0
    %139 = vmatprep.subr.mxu0 0.0
    %140 = vmatpush1.msra.mxu0 0.0
    %141 = vmatprep.subr.mxu0 0.0
    %142 = vmatpush1.msra.mxu0 0.0
    %143 = vmatprep.subr.mxu0 0.0
    %144 = vmatpush1.msra.mxu0 0.0
    %145 = vmatprep.subr.mxu0 0.0
    %146 = vmatpush1.msra.mxu0 0.0
    %147 = vmatprep.subr.mxu0 0.0
    %148 = vmatpush1.msra.mxu0 0.0
    %149 = vmatprep.subr.mxu0 0.0
    %150 = vmatpush1.msra.mxu0 0.0
    %151 = vmatprep.subr.mxu0 0.0
    %152 = vmatpush1.msra.mxu0 0.0
    %153 = vmatprep.subr.mxu0 0.0
    %154 = vmatpush1.msra.mxu0 0.0
    %155 = vmatprep.subr.mxu0 0.0
    %156 = vmatpush1.msra.mxu0 0.0
    %157 = vmatprep.subr.mxu0 0.0
    %158 = vmatpush1.msra.mxu0 0.0
    %159 = vmatprep.subr.mxu0 0.0
    %160 = vmatpush1.msra.mxu0 0.0
    %161 = vmatprep.subr.mxu0 0.0
    %162 = vmatpush1.msra.mxu0 0.0
    %163 = vmatprep.subr.mxu0 0.0
    %164 = vmatpush1.msra.mxu0 0.0
    %165 = vmatprep.subr.mxu0 0.0
    %166 = vmatpush1.msra.mxu0 0.0
    %167 = vmatprep.subr.mxu0 0.0
    %168 = vmatpush1.msra.mxu0 0.0
    %169 = vmatprep.subr.mxu0 0.0
    %170 = vmatpush1.msra.mxu0 0.0
    %171 = vmatprep.mubr.f32.mxu0 0.0
    %172 = vmatmul.mubr.f32.gmra.mrb[0].mxu0 %v96
    %v173 = vpop.f32.mrb[0].mxu0
    %v174 = vadd.f32 %v87, %v173
    %v175 = vpop.f32.mrb[0].mxu0
    %v176 = vadd.f32 %v91, %v175
    %177 = vmatprep.mubr.f32.mxu0 0.0
    %178 = vmatmul.mubr.f32.gmra.mrb[0].mxu0 %v99
    %v179 = vpop.f32.mrb[0].mxu0
    %v180 = vadd.f32 %v87, %v179
    %v181 = vpop.f32.mrb[0].mxu0
    %v182 = vadd.f32 %v91, %v181
    %183 = vmatprep.mubr.f32.mxu0 0.0
    %184 = vmatmul.mubr.f32.gmra.mrb[0].mxu0 %v102
    %v185 = vpop.f32.mrb[0].mxu0
    %v186 = vadd.f32 %v87, %v185
    %v187 = vpop.f32.mrb[0].mxu0
    %v188 = vadd.f32 %v91, %v187
    %189 = vmatprep.mubr.f32.mxu0 0.0
    %190 = vmatmul.mubr.f32.gmra.mrb[0].mxu0 %v105
    %v191 = vpop.f32.mrb[0].mxu0
    %v192 = vadd.f32 %v87, %v191
    %v193 = vpop.f32.mrb[0].mxu0
    %v194 = vadd.f32 %v91, %v193
    %195 = vdwg.mxu0
    %v196 = vld [vmem:[%s4] sm:$0x3]
    %v198 = vlaneseq
    %v199 = vshrl.u32 %v198, 7
    %v200 = vsub.s32 0, %v199
    %v201 = vrot.slane %v196, %v200
    %v202 = vlaneseq
    %v203 = vshrl.u32 %v202, 7
    %v204 = vsub.s32 1, %v203
    %v205 = vrot.slane %v196, %v204
    %208 = vmatprep.subr.mxu0 %v75
    %209 = vmatpush1.msra.mxu0 %v74
    %210 = vmatprep.subr.mxu0 %v77
    %211 = vmatpush1.msra.mxu0 %v76
    %212 = vmatprep.subr.mxu0 %v79
    %213 = vmatpush1.msra.mxu0 %v78
    %214 = vmatprep.subr.mxu0 %v81
    %215 = vmatpush1.msra.mxu0 %v80
    %216 = vmatprep.subr.mxu0 0.0
    %217 = vmatpush1.msra.mxu0 0.0
    %218 = vmatprep.subr.mxu0 0.0
    %219 = vmatpush1.msra.mxu0 0.0
    %220 = vmatprep.subr.mxu0 0.0
    %221 = vmatpush1.msra.mxu0 0.0
    %222 = vmatprep.subr.mxu0 0.0
    %223 = vmatpush1.msra.mxu0 0.0
    %224 = vmatprep.subr.mxu0 0.0
    %225 = vmatpush1.msra.mxu0 0.0
    %226 = vmatprep.subr.mxu0 0.0
    %227 = vmatpush1.msra.mxu0 0.0
    %228 = vmatprep.subr.mxu0 0.0
    %229 = vmatpush1.msra.mxu0 0.0
    %230 = vmatprep.subr.mxu0 0.0
    %231 = vmatpush1.msra.mxu0 0.0
    %232 = vmatprep.subr.mxu0 0.0
    %233 = vmatpush1.msra.mxu0 0.0
    %234 = vmatprep.subr.mxu0 0.0
    %235 = vmatpush1.msra.mxu0 0.0
    %236 = vmatprep.subr.mxu0 0.0
    %237 = vmatpush1.msra.mxu0 0.0
    %238 = vmatprep.subr.mxu0 0.0
    %239 = vmatpush1.msra.mxu0 0.0
    %240 = vmatprep.subr.mxu0 0.0
    %241 = vmatpush1.msra.mxu0 0.0
    %242 = vmatprep.subr.mxu0 0.0
    %243 = vmatpush1.msra.mxu0 0.0
    %244 = vmatprep.subr.mxu0 0.0
    %245 = vmatpush1.msra.mxu0 0.0
    %246 = vmatprep.subr.mxu0 0.0
    %247 = vmatpush1.msra.mxu0 0.0
    %248 = vmatprep.subr.mxu0 0.0
    %249 = vmatpush1.msra.mxu0 0.0
    %250 = vmatprep.subr.mxu0 0.0
    %251 = vmatpush1.msra.mxu0 0.0
    %252 = vmatprep.subr.mxu0 0.0
    %253 = vmatpush1.msra.mxu0 0.0
    %254 = vmatprep.subr.mxu0 0.0
    %255 = vmatpush1.msra.mxu0 0.0
    %256 = vmatprep.subr.mxu0 0.0
    %257 = vmatpush1.msra.mxu0 0.0
    %258 = vmatprep.subr.mxu0 0.0
    %259 = vmatpush1.msra.mxu0 0.0
    %260 = vmatprep.subr.mxu0 0.0
    %261 = vmatpush1.msra.mxu0 0.0
    %262 = vmatprep.subr.mxu0 0.0
    %263 = vmatpush1.msra.mxu0 0.0
    %264 = vmatprep.subr.mxu0 0.0
    %265 = vmatpush1.msra.mxu0 0.0
    %266 = vmatprep.subr.mxu0 0.0
    %267 = vmatpush1.msra.mxu0 0.0
    %268 = vmatprep.subr.mxu0 0.0
    %269 = vmatpush1.msra.mxu0 0.0
    %270 = vmatprep.subr.mxu0 0.0
    %271 = vmatpush1.msra.mxu0 0.0
    %272 = vmatprep.mubr.f32.mxu0 0.0
    %273 = vmatmul.mubr.f32.gmra.mrb[0].mxu0 %v96
    %v274 = vpop.f32.mrb[0].mxu0
    %v275 = vadd.f32 %v201, %v274
    %v276 = vpop.f32.mrb[0].mxu0
    %v277 = vadd.f32 %v205, %v276
    %278 = vmatprep.mubr.f32.mxu0 0.0
    %279 = vmatmul.mubr.f32.gmra.mrb[0].mxu0 %v99
    %v280 = vpop.f32.mrb[0].mxu0
    %v281 = vadd.f32 %v201, %v280
    %v282 = vpop.f32.mrb[0].mxu0
    %v283 = vadd.f32 %v205, %v282
    %284 = vmatprep.mubr.f32.mxu0 0.0
    %285 = vmatmul.mubr.f32.gmra.mrb[0].mxu0 %v102
    %v286 = vpop.f32.mrb[0].mxu0
    %v287 = vadd.f32 %v201, %v286
    %v288 = vpop.f32.mrb[0].mxu0
    %v289 = vadd.f32 %v205, %v288
    %290 = vmatprep.mubr.f32.mxu0 0.0
    %291 = vmatmul.mubr.f32.gmra.mrb[0].mxu0 %v105
    %v292 = vpop.f32.mrb[0].mxu0
    %v293 = vadd.f32 %v201, %v292
    %v294 = vpop.f32.mrb[0].mxu0
    %v295 = vadd.f32 %v205, %v294
    %296 = vdwg.mxu0
    %v297 = vxor.u32 %v275, 2147483648
    %v298 = vxor.u32 %v277, 2147483648
    %v299 = vxor.u32 %v281, 2147483648
    %v300 = vxor.u32 %v283, 2147483648
    %v301 = vxor.u32 %v287, 2147483648
    %v302 = vxor.u32 %v289, 2147483648
    %v303 = vxor.u32 %v293, 2147483648
    %v304 = vxor.u32 %v295, 2147483648
    %v305 = vmul.f32 %v297, 1.442695
    %v306 = vpow.pop %v305
    %v307 = vmul.f32 %v298, 1.442695
    %v308 = vpow.pop %v307
    %v309 = vmul.f32 %v299, 1.442695
    %v310 = vpow.pop %v309
    %v311 = vmul.f32 %v300, 1.442695
    %v312 = vpow.pop %v311
    %v313 = vmul.f32 %v301, 1.442695
    %v314 = vpow.pop %v313
    %v315 = vmul.f32 %v302, 1.442695
    %v316 = vpow.pop %v315
    %v317 = vmul.f32 %v303, 1.442695
    %v318 = vpow.pop %v317
    %v319 = vmul.f32 %v304, 1.442695
    %v320 = vpow.pop %v319
    %v321 = vadd.f32 %v306, 1.0
    %v322 = vadd.f32 %v308, 1.0
    %v323 = vadd.f32 %v310, 1.0
    %v324 = vadd.f32 %v312, 1.0
    %v325 = vadd.f32 %v314, 1.0
    %v326 = vadd.f32 %v316, 1.0
    %v327 = vadd.f32 %v318, 1.0
    %v328 = vadd.f32 %v320, 1.0
    %v329 = vrcp.pop %v321
    %v330 = vmul.f32 1.0, %v329
    %v331 = vrcp.pop %v322
    %v332 = vmul.f32 1.0, %v331
    %v333 = vrcp.pop %v323
    %v334 = vmul.f32 1.0, %v333
    %v335 = vrcp.pop %v324
    %v336 = vmul.f32 1.0, %v335
    %v337 = vrcp.pop %v325
    %v338 = vmul.f32 1.0, %v337
    %v339 = vrcp.pop %v326
    %v340 = vmul.f32 1.0, %v339
    %v341 = vrcp.pop %v327
    %v342 = vmul.f32 1.0, %v341
    %v343 = vrcp.pop %v328
    %v344 = vmul.f32 1.0, %v343
    %v345 = vmul.f32 %v330, %v174
    %v346 = vmul.f32 %v332, %v176
    %v347 = vmul.f32 %v334, %v180
    %v348 = vmul.f32 %v336, %v182
    %v349 = vmul.f32 %v338, %v186
    %v350 = vmul.f32 %v340, %v188
    %v351 = vmul.f32 %v342, %v192
    %v352 = vmul.f32 %v344, %v194
    %v353 = vmax.f32 %v345, 0.0
    %v354 = vmax.f32 %v346, 0.0
    %v355 = vmax.f32 %v347, 0.0
    %v356 = vmax.f32 %v348, 0.0
    %v357 = vmax.f32 %v349, 0.0
    %v358 = vmax.f32 %v350, 0.0
    %v359 = vmax.f32 %v351, 0.0
    %v360 = vmax.f32 %v352, 0.0
    %361 = vst [vmem:[#allocation8] sm:$0xff] %v353
    %vm362 = vcmask 523264
    %363 = vst.msk [vmem:[#allocation8 + $0x8] sm:$0xff] %vm362, %v354
    %364 = vst [vmem:[#allocation8 + $0x10] sm:$0xff] %v355
    %365 = vst.msk [vmem:[#allocation8 + $0x18] sm:$0xff] %vm362, %v356
    %366 = vst [vmem:[#allocation8 + $0x20] sm:$0xff] %v357
    %367 = vst.msk [vmem:[#allocation8 + $0x28] sm:$0xff] %vm362, %v358
    %368 = vst [vmem:[#allocation8 + $0x30] sm:$0xff] %v359
    %369 = vst.msk [vmem:[#allocation8 + $0x38] sm:$0xff] %vm362, %v360
    // Predicated region
    $region34: #{tpu_custom_call.1} parent=1 // pred_check
      _
    $region35: #{tpu_custom_call.1} parent=1 // pred_check_branch
      %371 = sbr.rel (0) target = $region37
    $region36: #{tpu_custom_call.1} parent=1 // pred_region
      %s373 = ssub.s32 1024, 1024
      %374 = vsyncadd [#allocation4], %s373
      %s375 = sshll.u32 [#allocation8], 4
      %s376 = int_to_ptr.vmem [resolvable:$true] %s375
      %381 = dma.vmem_to_hbm [thread:$0]  %s376, 1024, %s5, [#allocation4], 256, 256, 16
    $region37: #{tpu_custom_call.1} parent=1 // pred_fallthru
      _
    // Predicated region
    $region38: #{tpu_custom_call.1} parent=1 // pred_check
      _
    $region39: #{tpu_custom_call.1} parent=1 // pred_check_branch
      %383 = sbr.rel (0) target = $region41
    $region40: #{tpu_custom_call.1} parent=1 // pred_region
      %384 = dma.done [#allocation4], 1024
    $region41: #{tpu_custom_call.1} parent=1 // pred_fallthru
      _
    %385 = vsyncpa [#allocation3], 1
    %386 = vsyncpa [#allocation6], 1
    %387 = vsyncpa [#allocation4], 1

</llo_original>
